<compile_context>
chip_gen: v7x
topology: tpu7x:2x2x1
jax: 0.10.0
libtpu: 0.0.40
codegen_flags: <defaults>
</compile_context>

<pallas_src>
import functools
import math

import jax
import jax.numpy as jnp
from jax import lax
from jax.experimental import pallas as pl
from jax.experimental.pallas import tpu as pltpu

EPS = 1e-5                       # PyTorch BatchNorm1d default
_LANE = 128
_SUBLANE = 8
_WORK_BYTES = 8                  # f32 working copy + GELU temporaries per element
_INV_SQRT2 = 1.0 / math.sqrt(2.0)
_SQRT_2_OVER_PI = math.sqrt(2.0 / math.pi)


def _round_up(x, m):
    return ((x + m - 1) // m) * m


def _largest_divisor_le(m, cap):
    cap = max(1, min(cap, m))
    for d in range(cap, 0, -1):
        if m % d == 0:
            return d
    return 1


@functools.lru_cache(maxsize=1)
def _vmem_budgets():
    """(pipe_budget_bytes, vmem_limit_bytes), derived from the chip's VMEM."""
    cap = 64 << 20
    try:
        cap = int(pltpu.get_tpu_info().vmem_capacity_bytes)
    except Exception:
        pass
    if cap >= (96 << 20):            # v5e / v6e: 128 MiB physical VMEM
        return 64 << 20, 112 << 20
    return 24 << 20, 48 << 20        # v7x: 64 MiB physical VMEM per TC


def _gelu(y, approx):
    if approx:
        # tanh approximation: transcendental goes to the EUP slot (free on
        # HBM-bound kernels).  ~1e-3 abs error vs exact erf.
        return 0.5 * y * (1.0 + jnp.tanh(_SQRT_2_OVER_PI * (y + 0.044715 * y * y * y)))
    # nn.GELU() default (exact erf formulation).
    return 0.5 * y * (1.0 + lax.erf(y * _INV_SQRT2))


# ---------------------------------------------------------------------------
# Path A: whole batch resident per feature tile (single HBM pass).
# ---------------------------------------------------------------------------
def _bn_gelu_onepass_kernel(x_ref, gamma_ref, beta_ref, o_ref, *, approx):
    x = x_ref[...].astype(jnp.float32)                  # (N, tc)
    inv_n = 1.0 / x.shape[0]

    mean = jnp.sum(x, axis=0, keepdims=True) * inv_n    # (1, tc)
    d = x - mean
    var = jnp.sum(d * d, axis=0, keepdims=True) * inv_n # centered -> no cancellation
    inv_std = lax.rsqrt(var + EPS)

    scale = gamma_ref[...] * inv_std                    # (1, tc)
    y = d * scale + beta_ref[...]                       # single FMA-style pass

    o_ref[...] = _gelu(y, approx).astype(o_ref.dtype)


def _choose_tc(n_rows, c128, in_bytes, out_bytes, pipe_budget):
    m = c128 // _LANE
    # Live bytes per element: 2x double-buffered input + 2x output blocks in
    # the I/O dtype, plus the f32 working copy / GELU temporaries.
    per_elem = 2 * (in_bytes + out_bytes) + _WORK_BYTES
    per_lane = per_elem * max(n_rows, _SUBLANE)
    d_budget = max(1, pipe_budget // max(per_lane * _LANE, 1))
    # Target >= 4 grid steps when C allows (pipeline steady state; >= 2 steps
    # per TensorCore after megacore sharding), else >= 2, else one tile.
    if m >= 8:
        d_steps = m // 4
    elif m >= 2:
        d_steps = m // 2
    else:
        d_steps = 1
    d = _largest_divisor_le(m, min(d_budget, d_steps))  # tc divides c128
    return d * _LANE


def _bn_gelu_onepass(x, gamma2, beta2, tc, vmem_limit, approx):
    n, c_pad = x.shape
    grid = (c_pad // tc,)
    kernel = functools.partial(_bn_gelu_onepass_kernel, approx=approx)
    return pl.pallas_call(
        kernel,
        out_shape=jax.ShapeDtypeStruct((n, c_pad), x.dtype),
        grid_spec=pltpu.PrefetchScalarGridSpec(
            num_scalar_prefetch=0,
            grid=grid,
            in_specs=[
                pl.BlockSpec((n, tc), lambda j: (0, j)),
                pl.BlockSpec((1, tc), lambda j: (0, j)),
                pl.BlockSpec((1, tc), lambda j: (0, j)),
            ],
            out_specs=pl.BlockSpec((n, tc), lambda j: (0, j)),
        ),
        compiler_params=pltpu.CompilerParams(
            dimension_semantics=("parallel",),
            vmem_limit_bytes=vmem_limit,
        ),
    )(x, gamma2, beta2)


# ---------------------------------------------------------------------------
# Path B: large-N two-pass (batch-tiled stats accumulation, then apply).
# NOTE: stats use a single-sweep sum / sum-of-squares accumulation; for inputs
# with |mean| >> std this can lose precision (E[x^2]-E[x]^2 cancellation).
# TODO(synk): mean-shifted / Welford accumulation for the stats pass.
# ---------------------------------------------------------------------------
def _stats_kernel(x_ref, sum_ref, sq_ref):
    @pl.when(pl.program_id(1) == 0)
    def _():
        sum_ref[...] = jnp.zeros_like(sum_ref)
        sq_ref[...] = jnp.zeros_like(sq_ref)

    x = x_ref[...].astype(jnp.float32)                  # (tn, tc)
    sum_ref[...] += jnp.sum(x, axis=0, keepdims=True)
    sq_ref[...] += jnp.sum(x * x, axis=0, keepdims=True)


def _apply_kernel(x_ref, scale_ref, shift_ref, o_ref, *, approx):
    x = x_ref[...].astype(jnp.float32)                  # (tn, tc)
    y = x * scale_ref[...] + shift_ref[...]
    o_ref[...] = _gelu(y, approx).astype(o_ref.dtype)


def _choose_tiles_2pass(n_rows, c128, in_bytes, out_bytes, pipe_budget):
    m = c128 // _LANE
    tc = _largest_divisor_le(m, 4) * _LANE              # <= 512 lanes, divides c128
    per_elem = 2 * (in_bytes + out_bytes) + _WORK_BYTES
    per_row = per_elem * tc
    tn_max = max(_SUBLANE, (pipe_budget // max(per_row, 1)) // _SUBLANE * _SUBLANE)
    tn_max = min(tn_max, 512)                           # keep N-padding small
    n8 = _round_up(n_rows, _SUBLANE)
    rows8 = n8 // _SUBLANE
    cap8 = max(1, min(tn_max // _SUBLANE, rows8))
    d8 = _largest_divisor_le(rows8, cap8)
    # Prefer a tile that divides round_up(N, 8) (pad <= 7 rows); fall back to
    # the budget cap only if the best divisor would make tiles tiny.
    if d8 * _SUBLANE >= 64 or d8 == rows8:
        tn = d8 * _SUBLANE
    else:
        tn = cap8 * _SUBLANE
    return tn, tc


def _bn_gelu_twopass(x, gamma2, beta2, n_true, tn, tc, vmem_limit, approx):
    n_pad, c_pad = x.shape

    # Pass 1: per-feature sum / sum-of-squares (zero-padded rows contribute 0).
    sums, sqs = pl.pallas_call(
        _stats_kernel,
        out_shape=(
            jax.ShapeDtypeStruct((1, c_pad), jnp.float32),
            jax.ShapeDtypeStruct((1, c_pad), jnp.float32),
        ),
        grid_spec=pltpu.PrefetchScalarGridSpec(
            num_scalar_prefetch=0,
            grid=(c_pad // tc, n_pad // tn),             # reduction axis last
            in_specs=[pl.BlockSpec((tn, tc), lambda j, i: (i, j))],
            out_specs=(
                pl.BlockSpec((1, tc), lambda j, i: (0, j)),
                pl.BlockSpec((1, tc), lambda j, i: (0, j)),
            ),
        ),
        compiler_params=pltpu.CompilerParams(
            dimension_semantics=("parallel", "arbitrary"),
            vmem_limit_bytes=vmem_limit,
        ),
    )(x)

    inv_n = 1.0 / n_true
    mean = sums * inv_n
    var = jnp.maximum(sqs * inv_n - mean * mean, 0.0)
    inv_std = lax.rsqrt(var + EPS)
    scale = gamma2 * inv_std
    shift = beta2 - mean * scale

    # Pass 2: y = x*scale + shift, GELU.
    kernel = functools.partial(_apply_kernel, approx=approx)
    return pl.pallas_call(
        kernel,
        out_shape=jax.ShapeDtypeStruct((n_pad, c_pad), x.dtype),
        grid_spec=pltpu.PrefetchScalarGridSpec(
            num_scalar_prefetch=0,
            grid=(n_pad // tn, c_pad // tc),
            in_specs=[
                pl.BlockSpec((tn, tc), lambda i, j: (i, j)),
                pl.BlockSpec((1, tc), lambda i, j: (0, j)),
                pl.BlockSpec((1, tc), lambda i, j: (0, j)),
            ],
            out_specs=pl.BlockSpec((tn, tc), lambda i, j: (i, j)),
        ),
        compiler_params=pltpu.CompilerParams(
            dimension_semantics=("parallel", "parallel"),
            vmem_limit_bytes=vmem_limit,
        ),
    )(x, scale, shift)


# ---------------------------------------------------------------------------
# Public wrapper.
# ---------------------------------------------------------------------------
@functools.partial(jax.jit, static_argnames=("force_two_pass", "approx_gelu"))
def bn_relu_forward(x, gamma, beta, force_two_pass=False, approx_gelu=False):
    """x: (N, C) float; gamma, beta: (C,). Returns (N, C) = GELU(BatchNorm1d(x))."""
    n, c = x.shape
    in_b = x.dtype.itemsize
    out_b = x.dtype.itemsize
    c128 = _round_up(c, _LANE)
    pipe_budget, vmem_limit = _vmem_budgets()

    gamma2 = gamma.reshape(1, c).astype(jnp.float32)
    beta2 = beta.reshape(1, c).astype(jnp.float32)

    per_elem = 2 * (in_b + out_b) + _WORK_BYTES
    single_pass = (not force_two_pass) and (per_elem * n * _LANE <= pipe_budget)

    pad_c = c128 - c
    if pad_c:
        xp = jnp.pad(x, ((0, 0), (0, pad_c)))
        gp = jnp.pad(gamma2, ((0, 0), (0, pad_c)))
        bp = jnp.pad(beta2, ((0, 0), (0, pad_c)))
    else:
        xp, gp, bp = x, gamma2, beta2

    if single_pass:
        tc = _choose_tc(n, c128, in_b, out_b, pipe_budget)
        out = _bn_gelu_onepass(xp, gp, bp, tc, vmem_limit, approx_gelu)
    else:
        tn, tc = _choose_tiles_2pass(n, c128, in_b, out_b, pipe_budget)
        n_pad = _round_up(n, tn)
        if n_pad != n:
            xp = jnp.pad(xp, ((0, n_pad - n), (0, 0)))
        out = _bn_gelu_twopass(xp, gp, bp, n, tn, tc, vmem_limit, approx_gelu)

    if out.shape != (n, c):
        out = out[:n, :c]
    return out


def _reference(x, gamma, beta):
    xf = x.astype(jnp.float32)
    mean = jnp.mean(xf, axis=0, keepdims=True)
    var = jnp.mean((xf - mean) ** 2, axis=0, keepdims=True)
    y = (xf - mean) * lax.rsqrt(var + EPS) * gamma[None, :] + beta[None, :]
    return 0.5 * y * (1.0 + lax.erf(y / math.sqrt(2.0)))


if __name__ == "__main__":
    key = jax.random.PRNGKey(0)

    # --- Test 1: single-pass path, shapes matching BatchNorm1d on (N, features)
    N, FEATURES = 8, 32
    kx, kg, kb, key = jax.random.split(key, 4)
    x = jax.random.normal(kx, (N, FEATURES), dtype=jnp.float32)
    gamma = 1.0 + 0.1 * jax.random.normal(kg, (FEATURES,), dtype=jnp.float32)
    beta = 0.1 * jax.random.normal(kb, (FEATURES,), dtype=jnp.float32)

    out = jax.block_until_ready(bn_relu_forward(x, gamma, beta))
    ref = _reference(x, gamma, beta)
    assert out.shape == (N, FEATURES)
    assert jnp.allclose(out, ref, atol=2e-5, rtol=2e-5), float(
        jnp.max(jnp.abs(out - ref))
    )

    # --- Test 2: non-128-multiple C, single-pass path
    N1, F1 = 16, 200
    kx1, kg1, kb1, key = jax.random.split(key, 4)
    x1 = jax.random.normal(kx1, (N1, F1), dtype=jnp.float32)
    gamma1 = 1.0 + 0.1 * jax.random.normal(kg1, (F1,), dtype=jnp.float32)
    beta1 = 0.1 * jax.random.normal(kb1, (F1,), dtype=jnp.float32)

    out1 = jax.block_until_ready(bn_relu_forward(x1, gamma1, beta1))
    ref1 = _reference(x1, gamma1, beta1)
    assert out1.shape == (N1, F1)
    assert jnp.allclose(out1, ref1, atol=2e-5, rtol=2e-5), float(
        jnp.max(jnp.abs(out1 - ref1))
    )

    # --- Test 3: force the two-pass (large-N fallback) path on awkward shapes
    N2, F2 = 24, 200
    kx2, kg2, kb2, _ = jax.random.split(key, 4)
    x2 = jax.random.normal(kx2, (N2, F2), dtype=jnp.float32)
    gamma2 = 1.0 + 0.1 * jax.random.normal(kg2, (F2,), dtype=jnp.float32)
    beta2 = 0.1 * jax.random.normal(kb2, (F2,), dtype=jnp.float32)

    out2 = jax.block_until_ready(
        bn_relu_forward(x2, gamma2, beta2, force_two_pass=True)
    )
    ref2 = _reference(x2, gamma2, beta2)
    assert out2.shape == (N2, F2)
    assert jnp.allclose(out2, ref2, atol=2e-5, rtol=2e-5), float(
        jnp.max(jnp.abs(out2 - ref2))
    )

    print("KERNEL_OK")
</pallas_src>

<mosaic_0001>
module attributes {stable_mosaic.version = 11 : i64} {
  func.func @_bn_gelu_onepass_kernel(%arg0: i32, %arg1: memref<8x128xf32, #tpu.memory_space<vmem>>, %arg2: memref<1x128xf32, #tpu.memory_space<vmem>>, %arg3: memref<1x128xf32, #tpu.memory_space<vmem>>, %arg4: memref<8x128xf32, #tpu.memory_space<vmem>>) attributes {dimension_semantics = [#tpu.dimension_semantics<parallel>], iteration_bounds = array<i64: 1>, scalar_prefetch = 0 : i64, scratch_operands = 0 : i64, tpu.core_type = #tpu.core_type<tc>, window_params = [{transform_indices = @transform_0, window_bounds = array<i64: 8, 128>}, {transform_indices = @transform_1, window_bounds = array<i64: 1, 128>}, {transform_indices = @transform_2, window_bounds = array<i64: 1, 128>}, {transform_indices = @transform_3, window_bounds = array<i64: 8, 128>}]} {
    %c0 = arith.constant 0 : index
    %c0_0 = arith.constant 0 : index
    %0 = vector.load %arg1[%c0, %c0_0] : memref<8x128xf32, #tpu.memory_space<vmem>>, vector<8x128xf32>
    %cst = arith.constant dense<0.000000e+00> : vector<128xf32>
    %1 = vector.multi_reduction <add>, %0, %cst [0] : vector<8x128xf32> to vector<128xf32>
    %2 = vector.shape_cast %1 : vector<128xf32> to vector<1x128xf32>
    %cst_1 = arith.constant 1.250000e-01 : f32
    %3 = vector.broadcast %cst_1 : f32 to vector<1x128xf32>
    %4 = arith.mulf %2, %3 : vector<1x128xf32>
    %5 = vector.broadcast %4 : vector<1x128xf32> to vector<8x128xf32>
    %6 = arith.subf %0, %5 : vector<8x128xf32>
    %7 = arith.mulf %6, %6 : vector<8x128xf32>
    %cst_2 = arith.constant dense<0.000000e+00> : vector<128xf32>
    %8 = vector.multi_reduction <add>, %7, %cst_2 [0] : vector<8x128xf32> to vector<128xf32>
    %9 = vector.shape_cast %8 : vector<128xf32> to vector<1x128xf32>
    %cst_3 = arith.constant 1.250000e-01 : f32
    %10 = vector.broadcast %cst_3 : f32 to vector<1x128xf32>
    %11 = arith.mulf %9, %10 : vector<1x128xf32>
    %cst_4 = arith.constant 9.99999974E-6 : f32
    %12 = vector.broadcast %cst_4 : f32 to vector<1x128xf32>
    %13 = arith.addf %11, %12 : vector<1x128xf32>
    %14 = math.rsqrt %13 : vector<1x128xf32>
    %c0_5 = arith.constant 0 : index
    %c0_6 = arith.constant 0 : index
    %15 = vector.load %arg2[%c0_5, %c0_6] : memref<1x128xf32, #tpu.memory_space<vmem>>, vector<1x128xf32>
    %16 = arith.mulf %15, %14 : vector<1x128xf32>
    %17 = vector.broadcast %16 : vector<1x128xf32> to vector<8x128xf32>
    %18 = arith.mulf %6, %17 : vector<8x128xf32>
    %c0_7 = arith.constant 0 : index
    %c0_8 = arith.constant 0 : index
    %19 = vector.load %arg3[%c0_7, %c0_8] : memref<1x128xf32, #tpu.memory_space<vmem>>, vector<1x128xf32>
    %20 = vector.broadcast %19 : vector<1x128xf32> to vector<8x128xf32>
    %21 = arith.addf %18, %20 : vector<8x128xf32>
    %cst_9 = arith.constant 5.000000e-01 : f32
    %22 = vector.broadcast %cst_9 : f32 to vector<8x128xf32>
    %23 = arith.mulf %22, %21 : vector<8x128xf32>
    %cst_10 = arith.constant 0.707106769 : f32
    %24 = vector.broadcast %cst_10 : f32 to vector<8x128xf32>
    %25 = arith.mulf %21, %24 : vector<8x128xf32>
    %26 = math.erf %25 : vector<8x128xf32>
    %cst_11 = arith.constant 1.000000e+00 : f32
    %27 = vector.broadcast %cst_11 : f32 to vector<8x128xf32>
    %28 = arith.addf %27, %26 : vector<8x128xf32>
    %29 = arith.mulf %23, %28 : vector<8x128xf32>
    %c0_12 = arith.constant 0 : index
    %c0_13 = arith.constant 0 : index
    %30 = vector.load %arg4[%c0_12, %c0_13] : memref<8x128xf32, #tpu.memory_space<vmem>>, vector<8x128xf32>
    tpu.vector_store %arg4[%c0_12, %c0_13], %29 {strides = array<i32>} : memref<8x128xf32, #tpu.memory_space<vmem>>, vector<8x128xf32>,
    return
  }
  func.func @transform_0(%arg0: i32) -> (i32, i32) {
    %c0_i32 = arith.constant 0 : i32
    %c0_i32_0 = arith.constant 0 : i32
    return %c0_i32, %arg0 : i32, i32
  }
  func.func @transform_1(%arg0: i32) -> (i32, i32) {
    %c0_i32 = arith.constant 0 : i32
    %c0_i32_0 = arith.constant 0 : i32
    return %c0_i32, %arg0 : i32, i32
  }
  func.func @transform_2(%arg0: i32) -> (i32, i32) {
    %c0_i32 = arith.constant 0 : i32
    %c0_i32_0 = arith.constant 0 : i32
    return %c0_i32, %arg0 : i32, i32
  }
  func.func @transform_3(%arg0: i32) -> (i32, i32) {
    %c0_i32 = arith.constant 0 : i32
    %c0_i32_0 = arith.constant 0 : i32
    return %c0_i32, %arg0 : i32, i32
  }
}

</mosaic_0001>

<llo_original>
// kernel: bn_relu_forward.1
$region0: #{bn_relu_forward.1}
  #allocation0 [shape = 'u32[]', space=smem, size = 0x4, offset = 0x4, fixed_abs, tag = 'smem constant byte address 0x4 - core index']
  #allocation1 [shape = 'u32[144,128]{1,0:T(1,128)}', space=vmem, size = 0x12000, scoped, tag = 'internal scratch']
  %s0 = inlined_call_operand.vmem [shape: f32[8,128], index: 0, kind: input, shape index: {}]
  %s1 = inlined_call_operand.vmem [shape: f32[1,128], index: 1, kind: input, shape index: {}]
  %s2 = inlined_call_operand.vmem [shape: f32[1,128], index: 2, kind: input, shape index: {}]
  %s3 = inlined_call_operand.hbm [shape: f32[8,128], index: 3, kind: output, shape index: {}]
  %s4 = sld [smem:[#allocation0]]
  $region22: #{bn_relu_forward.1} parent=0
    _
  %s6 = ssub.s32 1, %s4
  %s7 = scalar_select 0, %s6, %s4
  $region1: #{bn_relu_forward.1} parent=0
    #allocation2 [shape = 'u8[4096]{0}', space=vmem, size = 0x1000, scoped, tag = 'output window, operand 0, single buffered']
    #allocation3 [shape = 's32[1]{0}', space=sflag, size = 0x4, scoped, tag = 'scoped memory for bn_relu_forward.1']
    %8 = vsyncpa [#allocation3], 0
    // Predicated region
    $region2: #{bn_relu_forward.1} parent=1 // pred_check
      _
    $region3: #{bn_relu_forward.1} parent=1 // pred_check_branch
      %10 = sbr.rel (0) target = $region5
    $region4: #{bn_relu_forward.1} parent=1 // pred_region
      _
    $region5: #{bn_relu_forward.1} parent=1 // pred_fallthru
      _
    // Predicated region
    $region6: #{bn_relu_forward.1} parent=1 // pred_check
      _
    $region7: #{bn_relu_forward.1} parent=1 // pred_check_branch
      %12 = sbr.rel (0) target = $region9
    $region8: #{bn_relu_forward.1} parent=1 // pred_region
      _
    $region9: #{bn_relu_forward.1} parent=1 // pred_fallthru
      _
    // Predicated region
    $region10: #{bn_relu_forward.1} parent=1 // pred_check
      _
    $region11: #{bn_relu_forward.1} parent=1 // pred_check_branch
      %14 = sbr.rel (0) target = $region13
    $region12: #{bn_relu_forward.1} parent=1 // pred_region
      _
    $region13: #{bn_relu_forward.1} parent=1 // pred_fallthru
      _
    %v15 = vld [vmem:[%s0] sm:$0xff]
    %v16 = vrot.slane %v15, 4
    %v17 = vadd.f32 %v15, %v16
    %v18 = vrot.slane %v17, 2
    %v19 = vadd.f32 %v17, %v18
    %v20 = vrot.slane %v19, 1
    %v21 = vadd.f32 %v19, %v20
    %v22 = vmul.f32 %v21, 0.125
    %v23 = vsub.f32 %v15, %v22
    %v24 = vmul.f32 %v23, %v23
    %v25 = vrot.slane %v24, 4
    %v26 = vadd.f32 %v24, %v25
    %v27 = vrot.slane %v26, 2
    %v28 = vadd.f32 %v26, %v27
    %v29 = vrot.slane %v28, 1
    %v30 = vadd.f32 %v28, %v29
    %v31 = vmul.f32 %v30, 0.125
    %v32 = vadd.f32 %v31, 1e-05
    %v33 = vrsqrt.pop %v32
    %v34 = vld [vmem:[%s1] sm:$0x1]
    %v35 = vmul.f32 %v34, %v33
    %v37 = vlaneseq
    %v38 = vshrl.u32 %v37, 7
    %v39 = vsub.s32 0, %v38
    %v40 = vrot.slane %v35, %v39
    %v42 = vmul.f32 %v23, %v40
    %v43 = vld [vmem:[%s2] sm:$0x1]
    %v45 = vlaneseq
    %v46 = vshrl.u32 %v45, 7
    %v47 = vsub.s32 0, %v46
    %v48 = vrot.slane %v43, %v47
    %v50 = vadd.f32 %v42, %v48
    %v51 = vmul.f32 %v50, 0.5
    %v52 = vmul.f32 %v50, 0.70710677
    %v53 = verf.f32.pop %v52
    %v54 = vadd.f32 %v53, 1.0
    %v55 = vmul.f32 %v51, %v54
    %56 = vst [vmem:[#allocation2] sm:$0xff] %v55
    // Predicated region
    $region14: #{bn_relu_forward.1} parent=1 // pred_check
      _
    $region15: #{bn_relu_forward.1} parent=1 // pred_check_branch
      %58 = sbr.rel (0) target = $region17
    $region16: #{bn_relu_forward.1} parent=1 // pred_region
      %s60 = ssub.s32 128, 128
      %61 = vsyncadd [#allocation3], %s60
      %s63 = sshll.u32 [#allocation2], 4
      %s64 = int_to_ptr.vmem [resolvable:$true] %s63
      %66 = dma.vmem_to_hbm [thread:$0]  %s64, 128, %s3, [#allocation3]
    $region17: #{bn_relu_forward.1} parent=1 // pred_fallthru
      _
    // Predicated region
    $region18: #{bn_relu_forward.1} parent=1 // pred_check
      _
    $region19: #{bn_relu_forward.1} parent=1 // pred_check_branch
      %68 = sbr.rel (0) target = $region21
    $region20: #{bn_relu_forward.1} parent=1 // pred_region
      %69 = dma.done [#allocation3], 128
    $region21: #{bn_relu_forward.1} parent=1 // pred_fallthru
      _
    %70 = vsyncpa [#allocation3], 1

</llo_original>
